<compile_context>
chip_gen: v6e
topology: v6e:2x2x1
jax: 0.10.0
libtpu: 0.0.40
codegen_flags: <defaults>
</compile_context>

<pallas_src>
import functools

import jax
import jax.numpy as jnp
from jax import lax
from jax.experimental import pallas as pl
from jax.experimental.pallas import tpu as pltpu

HIDDEN = 64            # per-branch hidden width (2 * 64 = 128 = one vreg of lanes)
FUSED_H = 2 * HIDDEN   # 128


def _make_kernel(action_dim):
    """Fused actor+critic kernel. Emits narrow (tb, A) policy and (tb, 1) value."""

    def kernel(x_ref, w1_ref, b12_ref, w2_ref, pol_ref, val_ref):
        x = x_ref[...]                                                    # (TB, S)
        b = b12_ref[...]                                                  # (2, 128)

        # ---- fused layer 1: [ha | hc] = relu(x @ [wa1|wc1] + [ba1|bc1]) ----
        h = jnp.dot(x, w1_ref[...], preferred_element_type=jnp.float32) + b[0:1, :]
        h = jnp.maximum(h, 0.0)                                           # (TB, 128)

        # ---- fused layer 2: block-diagonal weight -> logits in lanes [0,A),
        #      value in lane A, zeros elsewhere. -----------------------------
        y = jnp.dot(h, w2_ref[...], preferred_element_type=jnp.float32) + b[1:2, :]  # (TB, 128)

        # ---- masked softmax over the policy lanes only ----
        lane = lax.broadcasted_iota(jnp.int32, y.shape, 1)                # (TB, 128)
        pol_mask = lane < action_dim

        logits = jnp.where(pol_mask, y, -jnp.inf)
        m = jnp.max(logits, axis=-1, keepdims=True)
        e = jnp.exp(logits - m)                                           # pad lanes -> 0
        denom = jnp.sum(e, axis=-1, keepdims=True)
        policy = e / denom                                                # VPU divide: slack (HBM-bound)

        # narrow outputs: only the useful lanes go back to HBM
        pol_ref[...] = policy[:, :action_dim]                             # (TB, A)
        val_ref[...] = y[:, action_dim:action_dim + 1]                    # (TB, 1)

    return kernel


def pack_params(p, action_dim):
    """Pack per-layer torch-style params into the fused layout used by the kernel."""
    assert action_dim + 1 <= FUSED_H, "value lane must fit in the 128-lane slab"
    assert p["wa1"].shape[1] == HIDDEN and p["wc1"].shape[1] == HIDDEN, "hidden must be 64"

    # layer 1: (S, 128) weight
    w1 = jnp.concatenate([p["wa1"], p["wc1"]], axis=1)                    # (S, 128)

    # layer 2: block-diagonal (128, 128); lanes [0,A) <- actor head, lane A <- critic head
    w2 = jnp.zeros((FUSED_H, FUSED_H), jnp.float32)
    w2 = w2.at[:HIDDEN, :action_dim].set(p["wa2"])                        # (64, A)
    w2 = w2.at[HIDDEN:, action_dim:action_dim + 1].set(p["wc2"])          # (64, 1)

    # biases: row 0 = layer-1 bias [ba1|bc1], row 1 = layer-2 bias (actor lanes + value lane)
    b1 = jnp.concatenate([p["ba1"], p["bc1"]], axis=1)                    # (1, 128)
    b2 = jnp.zeros((1, FUSED_H), jnp.float32)
    b2 = b2.at[:, :action_dim].set(p["ba2"])
    b2 = b2.at[:, action_dim:action_dim + 1].set(p["bc2"])
    b12 = jnp.concatenate([b1, b2], axis=0)                               # (2, 128)

    return dict(w1=w1, b12=b12, w2=w2)


def _choose_tile(B, tile_b):
    """Batch tile: multiple of 8, capped at tile_b; >=2 grid steps when possible (v7x)."""
    b8 = ((B + 7) // 8) * 8
    tb = max(8, (min(tile_b, b8) // 8) * 8)
    # v7x: a single grid step leaves the second TensorCore idle; split when we can.
    if pl.cdiv(b8, tb) < 2 and b8 >= 16:
        tb = max(8, (b8 // 2 // 8) * 8)
    b_pad = pl.cdiv(B, tb) * tb
    return tb, b_pad


@functools.partial(jax.jit, static_argnames=("action_dim", "tile_b"))
def actor_critic_forward(state, packed, *, action_dim, tile_b=1024):
    """Returns (policy (B, A), value (B, 1)) matching the PyTorch forward."""
    B, S = state.shape

    tb, b_pad = _choose_tile(B, tile_b)
    if b_pad != B:
        # Padded rows run softmax on zero-state inputs; they are sliced off below,
        # so their contents are never read.
        state = jnp.pad(state, ((0, b_pad - B), (0, 0)))

    grid = (b_pad // tb,)

    pol, val = pl.pallas_call(
        _make_kernel(action_dim),
        out_shape=(
            jax.ShapeDtypeStruct((b_pad, action_dim), jnp.float32),
            jax.ShapeDtypeStruct((b_pad, 1), jnp.float32),
        ),
        grid_spec=pltpu.PrefetchScalarGridSpec(
            num_scalar_prefetch=0,
            grid=grid,
            in_specs=[
                pl.BlockSpec((tb, S), lambda i: (i, 0)),                  # x: tiled over batch
                pl.BlockSpec((S, FUSED_H), lambda i: (0, 0)),             # w1: resident
                pl.BlockSpec((2, FUSED_H), lambda i: (0, 0)),             # fused biases: resident
                pl.BlockSpec((FUSED_H, FUSED_H), lambda i: (0, 0)),       # w2: resident
            ],
            out_specs=(
                pl.BlockSpec((tb, action_dim), lambda i: (i, 0)),         # policy (full last dim)
                pl.BlockSpec((tb, 1), lambda i: (i, 0)),                  # value  (full last dim)
            ),
        ),
        compiler_params=pltpu.CompilerParams(
            dimension_semantics=("parallel",),                            # v7x: shard over 2 TCs
        ),
    )(state, packed["w1"], packed["b12"], packed["w2"])

    if b_pad != B:
        pol = pol[:B]
        val = val[:B]
    return pol, val


def init_params(key, state_dim, action_dim, hidden=HIDDEN):
    """Deterministic PyTorch-style (uniform fan-in) init, weights stored (in, out)."""
    ks = jax.random.split(key, 8)

    def linear(kw, kb, fan_in, fan_out):
        bound = 1.0 / jnp.sqrt(fan_in)
        w = jax.random.uniform(kw, (fan_in, fan_out), jnp.float32, -bound, bound)
        b = jax.random.uniform(kb, (1, fan_out), jnp.float32, -bound, bound)
        return w, b

    wa1, ba1 = linear(ks[0], ks[1], state_dim, hidden)
    wa2, ba2 = linear(ks[2], ks[3], hidden, action_dim)
    wc1, bc1 = linear(ks[4], ks[5], state_dim, hidden)
    wc2, bc2 = linear(ks[6], ks[7], hidden, 1)
    return dict(wa1=wa1, ba1=ba1, wa2=wa2, ba2=ba2,
                wc1=wc1, bc1=bc1, wc2=wc2, bc2=bc2)


def actor_critic_ref(state, p):
    """Pure-JAX reference matching the PyTorch forward."""
    ha = jnp.maximum(state @ p["wa1"] + p["ba1"], 0.0)
    policy = jax.nn.softmax(ha @ p["wa2"] + p["ba2"], axis=-1)
    hc = jnp.maximum(state @ p["wc1"] + p["bc1"], 0.0)
    value = hc @ p["wc2"] + p["bc2"]
    return policy, value


if __name__ == "__main__":
    state_dim, action_dim, batch = 16, 4, 64

    key = jax.random.PRNGKey(0)
    k_params, k_state = jax.random.split(key)
    params = init_params(k_params, state_dim, action_dim)
    packed = pack_params(params, action_dim)
    state = jax.random.normal(k_state, (batch, state_dim), dtype=jnp.float32)

    policy, value = actor_critic_forward(state, packed, action_dim=action_dim)
    jax.block_until_ready((policy, value))

    # sanity check against pure-JAX reference
    policy_ref, value_ref = actor_critic_ref(state, params)
    assert policy.shape == (batch, action_dim)
    assert value.shape == (batch, 1)
    assert jnp.allclose(policy, policy_ref, atol=1e-5, rtol=1e-5)
    assert jnp.allclose(value, value_ref, atol=1e-5, rtol=1e-5)
    assert jnp.allclose(jnp.sum(policy, axis=-1), 1.0, atol=1e-5)

    print("KERNEL_OK")
</pallas_src>

<mosaic_0001>
module attributes {stable_mosaic.version = 11 : i64} {
  func.func @kernel(%arg0: i32, %arg1: memref<32x16xf32, #tpu.memory_space<vmem>>, %arg2: memref<16x128xf32, #tpu.memory_space<vmem>>, %arg3: memref<2x128xf32, #tpu.memory_space<vmem>>, %arg4: memref<128x128xf32, #tpu.memory_space<vmem>>, %arg5: memref<32x4xf32, #tpu.memory_space<vmem>>, %arg6: memref<32x1xf32, #tpu.memory_space<vmem>>) attributes {dimension_semantics = [#tpu.dimension_semantics<parallel>], iteration_bounds = array<i64: 2>, scalar_prefetch = 0 : i64, scratch_operands = 0 : i64, tpu.core_type = #tpu.core_type<tc>, window_params = [{transform_indices = @transform_0, window_bounds = array<i64: 32, 16>}, {pipeline_mode = #tpu.pipeline_mode<synchronous>, transform_indices = @transform_1, window_bounds = array<i64: 16, 128>}, {pipeline_mode = #tpu.pipeline_mode<synchronous>, transform_indices = @transform_2, window_bounds = array<i64: 2, 128>}, {pipeline_mode = #tpu.pipeline_mode<synchronous>, transform_indices = @transform_3, window_bounds = array<i64: 128, 128>}, {transform_indices = @transform_4, window_bounds = array<i64: 32, 4>}, {transform_indices = @transform_5, window_bounds = array<i64: 32, 1>}]} {
    %c0 = arith.constant 0 : index
    %c0_0 = arith.constant 0 : index
    %0 = vector.load %arg1[%c0, %c0_0] : memref<32x16xf32, #tpu.memory_space<vmem>>, vector<32x16xf32>
    %c0_1 = arith.constant 0 : index
    %c0_2 = arith.constant 0 : index
    %1 = vector.load %arg3[%c0_1, %c0_2] : memref<2x128xf32, #tpu.memory_space<vmem>>, vector<2x128xf32>
    %c0_3 = arith.constant 0 : index
    %c0_4 = arith.constant 0 : index
    %2 = vector.load %arg2[%c0_3, %c0_4] : memref<16x128xf32, #tpu.memory_space<vmem>>, vector<16x128xf32>
    %cst = arith.constant dense<0.000000e+00> : vector<32x128xf32>
    %3 = tpu.matmul %0, %2, %cst {dimension_numbers = #tpu.dot_dimension_numbers<[1], [0], [0], [1], [0, 0, 1, 1], [], []>} : vector<32x16xf32>, vector<16x128xf32>, vector<32x128xf32> -> vector<32x128xf32>
    %4 = vector.extract_strided_slice %1 {offsets = [0, 0], sizes = [1, 128], strides = [1, 1]} : vector<2x128xf32> to vector<1x128xf32>
    %5 = vector.broadcast %4 : vector<1x128xf32> to vector<32x128xf32>
    %6 = arith.addf %3, %5 : vector<32x128xf32>
    %cst_5 = arith.constant 0.000000e+00 : f32
    %7 = vector.broadcast %cst_5 : f32 to vector<32x128xf32>
    %8 = arith.maximumf %6, %7 : vector<32x128xf32>
    %c0_6 = arith.constant 0 : index
    %c0_7 = arith.constant 0 : index
    %9 = vector.load %arg4[%c0_6, %c0_7] : memref<128x128xf32, #tpu.memory_space<vmem>>, vector<128x128xf32>
    %cst_8 = arith.constant dense<0.000000e+00> : vector<32x128xf32>
    %10 = tpu.matmul %8, %9, %cst_8 {dimension_numbers = #tpu.dot_dimension_numbers<[1], [0], [0], [1], [0, 0, 1, 1], [], []>} : vector<32x128xf32>, vector<128x128xf32>, vector<32x128xf32> -> vector<32x128xf32>
    %11 = vector.extract_strided_slice %1 {offsets = [1, 0], sizes = [1, 128], strides = [1, 1]} : vector<2x128xf32> to vector<1x128xf32>
    %12 = vector.broadcast %11 : vector<1x128xf32> to vector<32x128xf32>
    %13 = arith.addf %10, %12 : vector<32x128xf32>
    %14 = tpu.iota {dimensions = array<i32: 1>} : vector<32x128xi32>
    %c4_i32 = arith.constant 4 : i32
    %15 = vector.broadcast %c4_i32 : i32 to vector<32x128xi32>
    %16 = arith.cmpi slt, %14, %15 : vector<32x128xi32>
    %cst_9 = arith.constant 0xFF800000 : f32
    %17 = vector.broadcast %cst_9 : f32 to vector<32x128xf32>
    %18 = arith.select %16, %13, %17 : vector<32x128xi1>, vector<32x128xf32>
    %cst_10 = arith.constant dense<0xFF800000> : vector<32xf32>
    %19 = vector.multi_reduction <maximumf>, %18, %cst_10 [1] : vector<32x128xf32> to vector<32xf32>
    %20 = vector.shape_cast %19 : vector<32xf32> to vector<32x1xf32>
    %21 = vector.broadcast %20 : vector<32x1xf32> to vector<32x128xf32>
    %22 = arith.subf %18, %21 : vector<32x128xf32>
    %23 = math.exp %22 : vector<32x128xf32>
    %cst_11 = arith.constant dense<0.000000e+00> : vector<32xf32>
    %24 = vector.multi_reduction <add>, %23, %cst_11 [1] : vector<32x128xf32> to vector<32xf32>
    %25 = vector.shape_cast %24 : vector<32xf32> to vector<32x1xf32>
    %26 = vector.broadcast %25 : vector<32x1xf32> to vector<32x128xf32>
    %27 = arith.divf %23, %26 : vector<32x128xf32>
    %28 = vector.extract_strided_slice %27 {offsets = [0, 0], sizes = [32, 4], strides = [1, 1]} : vector<32x128xf32> to vector<32x4xf32>
    %c0_12 = arith.constant 0 : index
    %c0_13 = arith.constant 0 : index
    %29 = vector.load %arg5[%c0_12, %c0_13] : memref<32x4xf32, #tpu.memory_space<vmem>>, vector<32x4xf32>
    tpu.vector_store %arg5[%c0_12, %c0_13], %28 {strides = array<i32>} : memref<32x4xf32, #tpu.memory_space<vmem>>, vector<32x4xf32>,
    %30 = vector.extract_strided_slice %13 {offsets = [0, 4], sizes = [32, 1], strides = [1, 1]} : vector<32x128xf32> to vector<32x1xf32>
    %c0_14 = arith.constant 0 : index
    %c0_15 = arith.constant 0 : index
    %31 = vector.load %arg6[%c0_14, %c0_15] : memref<32x1xf32, #tpu.memory_space<vmem>>, vector<32x1xf32>
    tpu.vector_store %arg6[%c0_14, %c0_15], %30 {strides = array<i32>} : memref<32x1xf32, #tpu.memory_space<vmem>>, vector<32x1xf32>,
    return
  }
  func.func @transform_0(%arg0: i32) -> (i32, i32) {
    %c0_i32 = arith.constant 0 : i32
    %c0_i32_0 = arith.constant 0 : i32
    return %arg0, %c0_i32 : i32, i32
  }
  func.func @transform_1(%arg0: i32) -> (i32, i32) {
    %c0_i32 = arith.constant 0 : i32
    %c0_i32_0 = arith.constant 0 : i32
    %c0_i32_1 = arith.constant 0 : i32
    return %c0_i32, %c0_i32_0 : i32, i32
  }
  func.func @transform_2(%arg0: i32) -> (i32, i32) {
    %c0_i32 = arith.constant 0 : i32
    %c0_i32_0 = arith.constant 0 : i32
    %c0_i32_1 = arith.constant 0 : i32
    return %c0_i32, %c0_i32_0 : i32, i32
  }
  func.func @transform_3(%arg0: i32) -> (i32, i32) {
    %c0_i32 = arith.constant 0 : i32
    %c0_i32_0 = arith.constant 0 : i32
    %c0_i32_1 = arith.constant 0 : i32
    return %c0_i32, %c0_i32_0 : i32, i32
  }
  func.func @transform_4(%arg0: i32) -> (i32, i32) {
    %c0_i32 = arith.constant 0 : i32
    %c0_i32_0 = arith.constant 0 : i32
    return %arg0, %c0_i32 : i32, i32
  }
  func.func @transform_5(%arg0: i32) -> (i32, i32) {
    %c0_i32 = arith.constant 0 : i32
    %c0_i32_0 = arith.constant 0 : i32
    return %arg0, %c0_i32 : i32, i32
  }
}

</mosaic_0001>

<llo_original>
// kernel: actor_critic_forward.1
$region0: #{actor_critic_forward.1}
  #allocation0 [shape = 'u32[]', space=smem, size = 0x4, offset = 0x4, fixed_abs, tag = 'smem constant byte address 0x4 - core index']
  #allocation1 [shape = 'u32[144,128]{1,0:T(1,128)}', space=vmem, size = 0x12000, scoped, tag = 'internal scratch']
  %s0 = inlined_call_operand.vmem [shape: f32[64,16], index: 0, kind: input, shape index: {}]
  %s1 = inlined_call_operand.vmem [shape: f32[16,128], index: 1, kind: input, shape index: {}]
  %s2 = inlined_call_operand.vmem [shape: f32[2,128], index: 2, kind: input, shape index: {}]
  %s3 = inlined_call_operand.hbm [shape: f32[128,128], index: 3, kind: input, shape index: {}]
  %s4 = inlined_call_operand.vmem [shape: f32[64,4], index: 4, kind: output, shape index: {0}]
  %s5 = inlined_call_operand.vmem [shape: f32[64,1], index: 5, kind: output, shape index: {1}]
  %6 = xla_tuple %s4, %s5
  %s7 = sld [smem:[#allocation0]]
  $region61: #{actor_critic_forward.1} parent=0
    _
  %s9 = ssub.s32 1, %s7
  %s10 = scalar_select 0, %s9, %s7
  $region1: #{actor_critic_forward.1} parent=0
    #allocation2 [shape = 'u8[65536]{0}', space=vmem, size = 0x10000, scoped, tag = 'input window, operand 3, single buffered']
    #allocation3 [shape = 's32[2]{0}', space=sflag, size = 0x8, scoped, tag = 'scoped memory for actor_critic_forward.1']
    %11 = vsyncpa [#allocation3], 0
    loop: start=0, step=1, limit=4
    $region2: #{actor_critic_forward.1} parent=1 // loop_pre_header
      _
    $region3: #{actor_critic_forward.1} parent=1 // loop_header
      %s13 = sphi 0, %s17
      %p14 = scmp.ge.s32.totalorder %s13, 4
      %s23 = sphi 0, %s25
      %s26 = sphi 0, %s23
      %s27 = sphi 0, %s26
      %s43 = sphi 0, %s27
      %s47 = sphi 0, %s47
      %s49 = sphi 0, %s47
      %s50 = sphi 0, %s49
      %s64 = sphi 0, %s50
      %s68 = sphi 0, %s68
      %s70 = sphi 0, %s68
      %s71 = sphi 0, %s70
      %s85 = sphi 0, %s71
      %s89 = sphi 0, %s89
      %s91 = sphi 0, %s89
      %s92 = sphi 0, %s91
      %s106 = sphi 0, %s92
      %s112 = sphi 0, %s114
      %s115 = sphi 0, %s112
      %s116 = sphi 0, %s115
      %s132 = sphi 0, %s116
      %s138 = sphi 0, %s140
      %s141 = sphi 0, %s138
      %s142 = sphi 0, %s141
      %s158 = sphi 0, %s142
    $region4: #{actor_critic_forward.1} parent=1 // loop_header_branch
      %16 = sbr.rel (%p14) target = $region8
    $region5: #{actor_critic_forward.1} parent=1 // loop_body
      %s18 = ssub.s32 %s13, 1
      %s19 = ssub.s32 %s13, 2
      %s20 = sadd.s32 %s13, 1
      %s21 = ssub.s32 %s13, %s20
      %p22 = scmp.eq.s32.totalorder %s21, 0
      %s24 = sadd.s32 %s23, 1
      %s25 = scalar_select %p22, %s23, %s24
      %p28 = pneg %p22
      %p29 = scmp.eq.s32.totalorder %s13, 1
      %p30 = por %p28, %p29
      %p31 = scmp.ne.s32.totalorder %s23, %s26
      %p32 = scmp.eq.s32.totalorder %s13, 0
      %p33 = por %p31, %p32
      %p34 = scmp.ne.s32.totalorder %s23, %s26
      %p35 = scmp.eq.s32.totalorder %s18, 1
      %p36 = por %p34, %p35
      %p37 = scmp.ne.s32.totalorder %s26, %s27
      %p38 = scmp.eq.s32.totalorder %s18, 0
      %p39 = por %p37, %p38
      %p40 = scmp.ne.s32.totalorder %s26, %s27
      %p41 = scmp.eq.s32.totalorder %s19, 1
      %p42 = por %p40, %p41
      %p44 = scmp.ne.s32.totalorder %s27, %s43
      %p45 = scmp.eq.s32.totalorder %s19, 0
      %p46 = por %p44, %p45
      %s48 = sadd.s32 %s47, 1
      %p51 = scmp.eq.s32.totalorder %s13, 1
      %p52 = scmp.ne.s32.totalorder %s47, %s49
      %p53 = scmp.eq.s32.totalorder %s13, 0
      %p54 = por %p52, %p53
      %p55 = scmp.ne.s32.totalorder %s47, %s49
      %p56 = scmp.eq.s32.totalorder %s18, 1
      %p57 = por %p55, %p56
      %p58 = scmp.ne.s32.totalorder %s49, %s50
      %p59 = scmp.eq.s32.totalorder %s18, 0
      %p60 = por %p58, %p59
      %p61 = scmp.ne.s32.totalorder %s49, %s50
      %p62 = scmp.eq.s32.totalorder %s19, 1
      %p63 = por %p61, %p62
      %p65 = scmp.ne.s32.totalorder %s50, %s64
      %p66 = scmp.eq.s32.totalorder %s19, 0
      %p67 = por %p65, %p66
      %s69 = sadd.s32 %s68, 1
      %p72 = scmp.eq.s32.totalorder %s13, 1
      %p73 = scmp.ne.s32.totalorder %s68, %s70
      %p74 = scmp.eq.s32.totalorder %s13, 0
      %p75 = por %p73, %p74
      %p76 = scmp.ne.s32.totalorder %s68, %s70
      %p77 = scmp.eq.s32.totalorder %s18, 1
      %p78 = por %p76, %p77
      %p79 = scmp.ne.s32.totalorder %s70, %s71
      %p80 = scmp.eq.s32.totalorder %s18, 0
      %p81 = por %p79, %p80
      %p82 = scmp.ne.s32.totalorder %s70, %s71
      %p83 = scmp.eq.s32.totalorder %s19, 1
      %p84 = por %p82, %p83
      %p86 = scmp.ne.s32.totalorder %s71, %s85
      %p87 = scmp.eq.s32.totalorder %s19, 0
      %p88 = por %p86, %p87
      %s90 = sadd.s32 %s89, 1
      %p93 = scmp.eq.s32.totalorder %s13, 1
      %p94 = scmp.ne.s32.totalorder %s89, %s91
      %p95 = scmp.eq.s32.totalorder %s13, 0
      %p96 = por %p94, %p95
      %p97 = scmp.ne.s32.totalorder %s89, %s91
      %p98 = scmp.eq.s32.totalorder %s18, 1
      %p99 = por %p97, %p98
      %p100 = scmp.ne.s32.totalorder %s91, %s92
      %p101 = scmp.eq.s32.totalorder %s18, 0
      %p102 = por %p100, %p101
      %p103 = scmp.ne.s32.totalorder %s91, %s92
      %p104 = scmp.eq.s32.totalorder %s19, 1
      %p105 = por %p103, %p104
      %p107 = scmp.ne.s32.totalorder %s92, %s106
      %p108 = scmp.eq.s32.totalorder %s19, 0
      %p109 = por %p107, %p108
      %s110 = ssub.s32 %s13, %s20
      %p111 = scmp.eq.s32.totalorder %s110, 0
      %s113 = sadd.s32 %s112, 1
      %s114 = scalar_select %p111, %s112, %s113
      %p117 = pneg %p111
      %p118 = scmp.eq.s32.totalorder %s13, 1
      %p119 = por %p117, %p118
      %p120 = scmp.ne.s32.totalorder %s112, %s115
      %p121 = scmp.eq.s32.totalorder %s13, 0
      %p122 = por %p120, %p121
      %p123 = scmp.ne.s32.totalorder %s112, %s115
      %p124 = scmp.eq.s32.totalorder %s18, 1
      %p125 = por %p123, %p124
      %p126 = scmp.ne.s32.totalorder %s115, %s116
      %p127 = scmp.eq.s32.totalorder %s18, 0
      %p128 = por %p126, %p127
      %p129 = scmp.ne.s32.totalorder %s115, %s116
      %p130 = scmp.eq.s32.totalorder %s19, 1
      %p131 = por %p129, %p130
      %p133 = scmp.ne.s32.totalorder %s116, %s132
      %p134 = scmp.eq.s32.totalorder %s19, 0
      %p135 = por %p133, %p134
      %s136 = ssub.s32 %s13, %s20
      %p137 = scmp.eq.s32.totalorder %s136, 0
      %s139 = sadd.s32 %s138, 1
      %s140 = scalar_select %p137, %s138, %s139
      %p143 = pneg %p137
      %p144 = scmp.eq.s32.totalorder %s13, 1
      %p145 = por %p143, %p144
      %p146 = scmp.ne.s32.totalorder %s138, %s141
      %p147 = scmp.eq.s32.totalorder %s13, 0
      %p148 = por %p146, %p147
      %p149 = scmp.ne.s32.totalorder %s138, %s141
      %p150 = scmp.eq.s32.totalorder %s18, 1
      %p151 = por %p149, %p150
      %p152 = scmp.ne.s32.totalorder %s141, %s142
      %p153 = scmp.eq.s32.totalorder %s18, 0
      %p154 = por %p152, %p153
      %p155 = scmp.ne.s32.totalorder %s141, %s142
      %p156 = scmp.eq.s32.totalorder %s19, 1
      %p157 = por %p155, %p156
      %p159 = scmp.ne.s32.totalorder %s142, %s158
      %p160 = scmp.eq.s32.totalorder %s19, 0
      %p161 = por %p159, %p160
      %p162 = scmp.le.s32.totalorder 1, %s13
      %p163 = scmp.lt.s32.totalorder %s13, 3
      %p164 = pnand %p162, %p163
      %p165 = pneg %p164
      // Predicated region
      $region9: #{actor_critic_forward.1} parent=5 // pred_check
        _
      $region10: #{actor_critic_forward.1} parent=5 // pred_check_branch
        %167 = sbr.rel (%p164) target = $region12
      $region11: #{actor_critic_forward.1} parent=5 // pred_region
        %s168 = ssub.s32 %s13, 1
        // Predicated region
        $region13: #{actor_critic_forward.1} parent=11 // pred_check
          %p169 = pneg %p60
        $region14: #{actor_critic_forward.1} parent=11 // pred_check_branch
          %171 = sbr.rel (%p169) target = $region16
        $region15: #{actor_critic_forward.1} parent=11 // pred_region
          _
        $region16: #{actor_critic_forward.1} parent=11 // pred_fallthru
          _
        // Predicated region
        $region17: #{actor_critic_forward.1} parent=11 // pred_check
          %p172 = pneg %p81
        $region18: #{actor_critic_forward.1} parent=11 // pred_check_branch
          %174 = sbr.rel (%p172) target = $region20
        $region19: #{actor_critic_forward.1} parent=11 // pred_region
          _
        $region20: #{actor_critic_forward.1} parent=11 // pred_fallthru
          _
        // Predicated region
        $region21: #{actor_critic_forward.1} parent=11 // pred_check
          %p175 = pneg %p102
        $region22: #{actor_critic_forward.1} parent=11 // pred_check_branch
          %177 = sbr.rel (%p175) target = $region24
        $region23: #{actor_critic_forward.1} parent=11 // pred_region
          %s179 = ssub.s32 2048, 2048
          %180 = vsyncadd [#allocation3], %s179
          %s181 = sshll.u32 [#allocation2], 4
          %s182 = int_to_ptr.vmem [resolvable:$true] %s181
          %187 = dma.hbm_to_vmem [thread:$0]  %s3, 2048, %s182, [#allocation3], 128, 128, 8
        $region24: #{actor_critic_forward.1} parent=11 // pred_fallthru
          _
      $region12: #{actor_critic_forward.1} parent=5 // pred_fallthru
        _
      %p188 = scmp.lt.s32.totalorder %s13, 2
      // Predicated region
      $region25: #{actor_critic_forward.1} parent=5 // pred_check
        %p189 = pneg %p188
      $region26: #{actor_critic_forward.1} parent=5 // pred_check_branch
        %191 = sbr.rel (%p189) target = $region28
      $region27: #{actor_critic_forward.1} parent=5 // pred_region
        // Predicated region
        $region29: #{actor_critic_forward.1} parent=27 // pred_check
          %p192 = pneg %p33
        $region30: #{actor_critic_forward.1} parent=27 // pred_check_branch
          %194 = sbr.rel (%p192) target = $region32
        $region31: #{actor_critic_forward.1} parent=27 // pred_region
          %s195 = smul.u32 4, %s13
          %p196 = scmp.lt.s32.totalorder %s195, 7
          %s197 = scalar_select %p196, %s195, 7
          %s198 = smul.addr %s197, 8
          %s199 = scalar_lea.vmem %s0, %s198
          %s200 = smul.u32 4, %s13
        $region32: #{actor_critic_forward.1} parent=27 // pred_fallthru
          _
      $region28: #{actor_critic_forward.1} parent=5 // pred_fallthru
        _
      %p201 = scmp.le.s32.totalorder 1, %s13
      %p202 = scmp.lt.s32.totalorder %s13, 3
      %p203 = pnand %p201, %p202
      %p204 = pneg %p203
      // Predicated region
      $region33: #{actor_critic_forward.1} parent=5 // pred_check
        _
      $region34: #{actor_critic_forward.1} parent=5 // pred_check_branch
        %206 = sbr.rel (%p203) target = $region36
      $region35: #{actor_critic_forward.1} parent=5 // pred_region
        %s207 = ssub.s32 %s13, 1
        // Predicated region
        $region37: #{actor_critic_forward.1} parent=35 // pred_check
          %p208 = pneg %p102
        $region38: #{actor_critic_forward.1} parent=35 // pred_check_branch
          %210 = sbr.rel (%p208) target = $region40
        $region39: #{actor_critic_forward.1} parent=35 // pred_region
          %211 = dma.done [#allocation3], 2048
        $region40: #{actor_critic_forward.1} parent=35 // pred_fallthru
          _
        %s212 = smul.u32 4, %s18
        %p213 = scmp.lt.s32.totalorder %s212, 7
        %s214 = scalar_select %p213, %s212, 7
        %s215 = smul.addr %s214, 8
        %s216 = scalar_lea.vmem %s0, %s215
        %p217 = pneg %p39
        %p218 = pneg %p36
        %p219 = pneg %p60
        %p220 = pneg %p57
        %p221 = pneg %p81
        %p222 = pneg %p78
        %p223 = pneg %p102
        %p224 = pneg %p99
        %p225 = pneg %p128
        %p226 = pneg %p125
        %s227 = smul.u32 4, %s18
        %p228 = scmp.lt.s32.totalorder %s227, 7
        %s229 = scalar_select %p228, %s227, 7
        %s230 = smul.addr %s229, 8
        %s231 = scalar_lea.vmem %s4, %s230
        %p232 = pneg %p154
        %p233 = pneg %p151
        %s234 = smul.u32 4, %s18
        %p235 = scmp.lt.s32.totalorder %s234, 7
        %s236 = scalar_select %p235, %s234, 7
        %s237 = smul.addr %s236, 8
        %s238 = scalar_lea.vmem %s5, %s237
        %s239 = smul.u32 4, %s18
        %p240 = scmp.lt.s32.totalorder %s239, 7
        %s241 = scalar_select %p240, %s239, 7
        %s242 = smul.addr %s241, 8
        %s243 = scalar_lea.vmem %s0, %s242
        %s244 = smul.u32 4, %s18
        %s245 = smul.u32 4, %s18
        %p246 = scmp.lt.s32.totalorder %s245, 7
        %s247 = scalar_select %p246, %s245, 7
        %s248 = smul.addr %s247, 8
        %s249 = scalar_lea.vmem %s4, %s248
        %s250 = smul.u32 4, %s18
        %s251 = smul.u32 4, %s18
        %p252 = scmp.lt.s32.totalorder %s251, 7
        %s253 = scalar_select %p252, %s251, 7
        %s254 = smul.addr %s253, 8
        %s255 = scalar_lea.vmem %s5, %s254
        %s256 = smul.u32 4, %s18
        %v257 = vld [vmem:[%s243] sm:$0xff]
        %v258 = vld [vmem:[%s243 + $0x8] sm:$0xff]
        %v259 = vld [vmem:[%s243 + $0x10] sm:$0xff]
        %v260 = vld [vmem:[%s243 + $0x18] sm:$0xff]
        %v261 = vld [vmem:[%s2] sm:$0x3]
        %v262 = vld [vmem:[%s1] sm:$0xff]
        %v263 = vld [vmem:[%s1 + $0x8] sm:$0xff]
        %v264 = vlaneseq
        %v265 = vshrl.u32 %v264, 7
        %v266 = vsub.s32 0, %v265
        %v267 = vrot.slane %v261, %v266
        %vm268 = vcmask 130048
        %v270 = vsel %vm268, %v257, 0
        %v273 = vsel %vm268, %v258, 0
        %v276 = vsel %vm268, %v259, 0
        %v279 = vsel %vm268, %v260, 0
        %281 = vmatprep.subr.mxu0 0.0
        %282 = vmatpush1.msra.mxu0 0.0
        %283 = vmatprep.subr.mxu0 0.0
        %284 = vmatpush1.msra.mxu0 0.0
        %285 = vmatprep.subr.mxu0 0.0
        %286 = vmatpush1.msra.mxu0 0.0
        %287 = vmatprep.subr.mxu0 0.0
        %288 = vmatpush1.msra.mxu0 0.0
        %289 = vmatprep.subr.mxu0 0.0
        %290 = vmatpush1.msra.mxu0 0.0
        %291 = vmatprep.subr.mxu0 0.0
        %292 = vmatpush1.msra.mxu0 0.0
        %293 = vmatprep.subr.mxu0 0.0
        %294 = vmatpush1.msra.mxu0 0.0
        %295 = vmatprep.subr.mxu0 0.0
        %296 = vmatpush1.msra.mxu0 0.0
        %297 = vmatprep.subr.mxu0 0.0
        %298 = vmatpush1.msra.mxu0 0.0
        %299 = vmatprep.subr.mxu0 0.0
        %300 = vmatpush1.msra.mxu0 0.0
        %301 = vmatprep.subr.mxu0 0.0
        %302 = vmatpush1.msra.mxu0 0.0
        %303 = vmatprep.subr.mxu0 0.0
        %304 = vmatpush1.msra.mxu0 0.0
        %305 = vmatprep.subr.mxu0 0.0
        %306 = vmatpush1.msra.mxu0 0.0
        %307 = vmatprep.subr.mxu0 0.0
        %308 = vmatpush1.msra.mxu0 0.0
        %309 = vmatprep.subr.mxu0 0.0
        %310 = vmatpush1.msra.mxu0 %v263
        %311 = vmatprep.subr.mxu0 0.0
        %312 = vmatpush1.msra.mxu0 %v262
        %313 = vmatprep.subr.mxu0 0.0
        %314 = vmatpush2.msra.mxu0 0.0
        %315 = vmatprep.subr.mxu0 0.0
        %316 = vmatpush2.msra.mxu0 0.0
        %317 = vmatprep.subr.mxu0 0.0
        %318 = vmatpush2.msra.mxu0 0.0
        %319 = vmatprep.subr.mxu0 0.0
        %320 = vmatpush2.msra.mxu0 0.0
        %321 = vmatprep.subr.mxu0 0.0
        %322 = vmatpush2.msra.mxu0 0.0
        %323 = vmatprep.subr.mxu0 0.0
        %324 = vmatpush2.msra.mxu0 0.0
        %325 = vmatprep.subr.mxu0 0.0
        %326 = vmatpush2.msra.mxu0 0.0
        %327 = vmatprep.subr.mxu0 0.0
        %328 = vmatpush2.msra.mxu0 0.0
        %329 = vmatprep.subr.mxu0 0.0
        %330 = vmatpush2.msra.mxu0 0.0
        %331 = vmatprep.subr.mxu0 0.0
        %332 = vmatpush2.msra.mxu0 0.0
        %333 = vmatprep.subr.mxu0 0.0
        %334 = vmatpush2.msra.mxu0 0.0
        %335 = vmatprep.subr.mxu0 0.0
        %336 = vmatpush2.msra.mxu0 0.0
        %337 = vmatprep.subr.mxu0 0.0
        %338 = vmatpush2.msra.mxu0 0.0
        %339 = vmatprep.subr.mxu0 0.0
        %340 = vmatpush2.msra.mxu0 0.0
        %341 = vmatprep.subr.mxu0 0.0
        %342 = vmatpush2.msra.mxu0 0.0
        %343 = vmatprep.subr.mxu0 0.0
        %344 = vmatpush2.msra.mxu0 0.0
        %345 = vmatprep.mubr.f32.mxu0 0.0
        %346 = vmatmul.mubr.f32.gmra.mxu0 %v270
        %v347 = vpop.f32.mrf.mxu0
        %v348 = vadd.f32 %v267, %v347
        %v349 = vpop.f32.mrf.mxu0
        %350 = vmatprep.mubr.f32.mxu0 0.0
        %351 = vmatmul.mubr.f32.gmra.mxu0 %v273
        %v352 = vpop.f32.mrf.mxu0
        %v353 = vadd.f32 %v267, %v352
        %v354 = vpop.f32.mrf.mxu0
        %355 = vmatprep.mubr.f32.mxu0 0.0
        %356 = vmatmul.mubr.f32.gmra.mxu0 %v276
        %v357 = vpop.f32.mrf.mxu0
        %v358 = vadd.f32 %v267, %v357
        %v359 = vpop.f32.mrf.mxu0
        %360 = vmatprep.mubr.f32.mxu0 0.0
        %361 = vmatmul.mubr.f32.gmra.mxu0 %v279
        %v362 = vpop.f32.mrf.mxu0
        %v363 = vadd.f32 %v267, %v362
        %v364 = vpop.f32.mrf.mxu0
        %365 = vdwg.mxu0
        %v366 = vmax.f32 %v348, 0.0
        %v367 = vmax.f32 %v353, 0.0
        %v368 = vmax.f32 %v358, 0.0
        %v369 = vmax.f32 %v363, 0.0
        %v370 = vld [vmem:[#allocation2] sm:$0xff]
        %v371 = vld [vmem:[#allocation2 + $0x8] sm:$0xff]
        %v372 = vld [vmem:[#allocation2 + $0x10] sm:$0xff]
        %v373 = vld [vmem:[#allocation2 + $0x18] sm:$0xff]
        %v374 = vld [vmem:[#allocation2 + $0x20] sm:$0xff]
        %v375 = vld [vmem:[#allocation2 + $0x28] sm:$0xff]
        %v376 = vld [vmem:[#allocation2 + $0x30] sm:$0xff]
        %v377 = vld [vmem:[#allocation2 + $0x38] sm:$0xff]
        %v378 = vld [vmem:[#allocation2 + $0x40] sm:$0xff]
        %v379 = vld [vmem:[#allocation2 + $0x48] sm:$0xff]
        %v380 = vld [vmem:[#allocation2 + $0x50] sm:$0xff]
        %v381 = vld [vmem:[#allocation2 + $0x58] sm:$0xff]
        %v382 = vld [vmem:[#allocation2 + $0x60] sm:$0xff]
        %v383 = vld [vmem:[#allocation2 + $0x68] sm:$0xff]
        %v384 = vld [vmem:[#allocation2 + $0x70] sm:$0xff]
        %v385 = vld [vmem:[#allocation2 + $0x78] sm:$0xff]
        %v386 = vlaneseq
        %v387 = vshrl.u32 %v386, 7
        %v388 = vsub.s32 1, %v387
        %v389 = vrot.slane %v261, %v388
        %390 = vmatprep.subr.mxu0 0.0
        %391 = vmatpush1.msra.mxu0 %v385
        %392 = vmatprep.subr.mxu0 0.0
        %393 = vmatpush1.msra.mxu0 %v384
        %394 = vmatprep.subr.mxu0 0.0
        %395 = vmatpush1.msra.mxu0 %v383
        %396 = vmatprep.subr.mxu0 0.0
        %397 = vmatpush1.msra.mxu0 %v382
        %398 = vmatprep.subr.mxu0 0.0
        %399 = vmatpush1.msra.mxu0 %v381
        %400 = vmatprep.subr.mxu0 0.0
        %401 = vmatpush1.msra.mxu0 %v380
        %402 = vmatprep.subr.mxu0 0.0
        %403 = vmatpush1.msra.mxu0 %v379
        %404 = vmatprep.subr.mxu0 0.0
        %405 = vmatpush1.msra.mxu0 %v378
        %406 = vmatprep.subr.mxu0 0.0
        %407 = vmatpush1.msra.mxu0 %v377
        %408 = vmatprep.subr.mxu0 0.0
        %409 = vmatpush1.msra.mxu0 %v376
        %410 = vmatprep.subr.mxu0 0.0
        %411 = vmatpush1.msra.mxu0 %v375
        %412 = vmatprep.subr.mxu0 0.0
        %413 = vmatpush1.msra.mxu0 %v374
        %414 = vmatprep.subr.mxu0 0.0
        %415 = vmatpush1.msra.mxu0 %v373
        %416 = vmatprep.subr.mxu0 0.0
        %417 = vmatpush1.msra.mxu0 %v372
        %418 = vmatprep.subr.mxu0 0.0
        %419 = vmatpush1.msra.mxu0 %v371
        %420 = vmatprep.subr.mxu0 0.0
        %421 = vmatpush1.msra.mxu0 %v370
        %422 = vmatprep.subr.mxu0 0.0
        %423 = vmatpush2.msra.mxu0 0.0
        %424 = vmatprep.subr.mxu0 0.0
        %425 = vmatpush2.msra.mxu0 0.0
        %426 = vmatprep.subr.mxu0 0.0
        %427 = vmatpush2.msra.mxu0 0.0
        %428 = vmatprep.subr.mxu0 0.0
        %429 = vmatpush2.msra.mxu0 0.0
        %430 = vmatprep.subr.mxu0 0.0
        %431 = vmatpush2.msra.mxu0 0.0
        %432 = vmatprep.subr.mxu0 0.0
        %433 = vmatpush2.msra.mxu0 0.0
        %434 = vmatprep.subr.mxu0 0.0
        %435 = vmatpush2.msra.mxu0 0.0
        %436 = vmatprep.subr.mxu0 0.0
        %437 = vmatpush2.msra.mxu0 0.0
        %438 = vmatprep.subr.mxu0 0.0
        %439 = vmatpush2.msra.mxu0 0.0
        %440 = vmatprep.subr.mxu0 0.0
        %441 = vmatpush2.msra.mxu0 0.0
        %442 = vmatprep.subr.mxu0 0.0
        %443 = vmatpush2.msra.mxu0 0.0
        %444 = vmatprep.subr.mxu0 0.0
        %445 = vmatpush2.msra.mxu0 0.0
        %446 = vmatprep.subr.mxu0 0.0
        %447 = vmatpush2.msra.mxu0 0.0
        %448 = vmatprep.subr.mxu0 0.0
        %449 = vmatpush2.msra.mxu0 0.0
        %450 = vmatprep.subr.mxu0 0.0
        %451 = vmatpush2.msra.mxu0 0.0
        %452 = vmatprep.subr.mxu0 0.0
        %453 = vmatpush2.msra.mxu0 0.0
        %454 = vmatprep.mubr.f32.mxu0 0.0
        %455 = vmatmul.mubr.f32.gmra.mxu0 %v366
        %v456 = vpop.f32.mrf.mxu0
        %v457 = vadd.f32 %v389, %v456
        %v458 = vpop.f32.mrf.mxu0
        %459 = vmatprep.mubr.f32.mxu0 0.0
        %460 = vmatmul.mubr.f32.gmra.mxu0 %v367
        %v461 = vpop.f32.mrf.mxu0
        %v462 = vadd.f32 %v389, %v461
        %v463 = vpop.f32.mrf.mxu0
        %464 = vmatprep.mubr.f32.mxu0 0.0
        %465 = vmatmul.mubr.f32.gmra.mxu0 %v368
        %v466 = vpop.f32.mrf.mxu0
        %v467 = vadd.f32 %v389, %v466
        %v468 = vpop.f32.mrf.mxu0
        %469 = vmatprep.mubr.f32.mxu0 0.0
        %470 = vmatmul.mubr.f32.gmra.mxu0 %v369
        %v471 = vpop.f32.mrf.mxu0
        %v472 = vadd.f32 %v389, %v471
        %v473 = vpop.f32.mrf.mxu0
        %474 = vdwg.mxu0
        %v475 = vlaneseq
        %v476 = vand.u32 %v475, 127
        %vm477 = vcmp.lt.s32.totalorder %v476, 4
        %v478 = vsel %vm477, %v457, -inf
        %v479 = vsel %vm477, %v462, -inf
        %v480 = vsel %vm477, %v467, -inf
        %v481 = vsel %vm477, %v472, -inf
        %482 = vmax.xlane.f32.xlu0 %v478
        %v483 = vpop.xlane.xlu0 %482
        %484 = vmax.xlane.f32.xlu0 %v479
        %v485 = vpop.xlane.xlu0 %484
        %486 = vmax.xlane.f32.xlu0 %v480
        %v487 = vpop.xlane.xlu0 %486
        %488 = vmax.xlane.f32.xlu0 %v481
        %v489 = vpop.xlane.xlu0 %488
        %v490 = vsub.f32 %v478, %v483
        %v491 = vsub.f32 %v479, %v485
        %v492 = vsub.f32 %v480, %v487
        %v493 = vsub.f32 %v481, %v489
        %v494 = vmul.f32 %v490, 1.442695
        %v495 = vpow.pop %v494
        %v496 = vmul.f32 %v491, 1.442695
        %v497 = vpow.pop %v496
        %v498 = vmul.f32 %v492, 1.442695
        %v499 = vpow.pop %v498
        %v500 = vmul.f32 %v493, 1.442695
        %v501 = vpow.pop %v500
        %502 = vadd.xlane.f32.xlu0 %v495
        %v503 = vpop.xlane.xlu0 %502
        %504 = vadd.xlane.f32.xlu0 %v497
        %v505 = vpop.xlane.xlu0 %504
        %506 = vadd.xlane.f32.xlu0 %v499
        %v507 = vpop.xlane.xlu0 %506
        %508 = vadd.xlane.f32.xlu0 %v501
        %v509 = vpop.xlane.xlu0 %508
        %v510 = vrcp.pop %v503
        %v511 = vmul.f32 %v495, %v510
        %v512 = vrcp.pop %v505
        %v513 = vmul.f32 %v497, %v512
        %v514 = vrcp.pop %v507
        %v515 = vmul.f32 %v499, %v514
        %v516 = vrcp.pop %v509
        %v517 = vmul.f32 %v501, %v516
        %vm518 = vcmask 31744
        %519 = vst.msk [vmem:[%s249] sm:$0xff] %vm518, %v511
        %520 = vst.msk [vmem:[%s249 + $0x8] sm:$0xff] %vm518, %v513
        %521 = vst.msk [vmem:[%s249 + $0x10] sm:$0xff] %vm518, %v515
        %522 = vst.msk [vmem:[%s249 + $0x18] sm:$0xff] %vm518, %v517
        %527 = vrot.lane.b32.xlu0 %v457, 124
        %v528 = vpop.permute.xlu0 %527
        %529 = vrot.lane.b32.xlu0 %v462, 124
        %v530 = vpop.permute.xlu0 %529
        %531 = vrot.lane.b32.xlu0 %v467, 124
        %v532 = vpop.permute.xlu0 %531
        %533 = vrot.lane.b32.xlu0 %v472, 124
        %v534 = vpop.permute.xlu0 %533
        %vm539 = vcmask 7168
        %540 = vst.msk [vmem:[%s255] sm:$0xff] %vm539, %v528
        %541 = vst.msk [vmem:[%s255 + $0x8] sm:$0xff] %vm539, %v530
        %542 = vst.msk [vmem:[%s255 + $0x10] sm:$0xff] %vm539, %v532
        %543 = vst.msk [vmem:[%s255 + $0x18] sm:$0xff] %vm539, %v534
        %s544 = smul.u32 4, %s18
        %p545 = scmp.lt.s32.totalorder %s544, 7
        %s546 = scalar_select %p545, %s544, 7
        %s547 = smul.addr %s546, 8
        %s548 = scalar_lea.vmem %s4, %s547
        %s549 = smul.u32 4, %s18
        %p550 = scmp.lt.s32.totalorder %s549, 7
        %s551 = scalar_select %p550, %s549, 7
        %s552 = smul.addr %s551, 8
        %s553 = scalar_lea.vmem %s5, %s552
        // Predicated region
        $region41: #{actor_critic_forward.1} parent=35 // pred_check
          %p554 = pneg %p125
        $region42: #{actor_critic_forward.1} parent=35 // pred_check_branch
          %556 = sbr.rel (%p554) target = $region44
        $region43: #{actor_critic_forward.1} parent=35 // pred_region
          %s557 = smul.u32 4, %s18
        $region44: #{actor_critic_forward.1} parent=35 // pred_fallthru
          _
        // Predicated region
        $region45: #{actor_critic_forward.1} parent=35 // pred_check
          %p558 = pneg %p151
        $region46: #{actor_critic_forward.1} parent=35 // pred_check_branch
          %560 = sbr.rel (%p558) target = $region48
        $region47: #{actor_critic_forward.1} parent=35 // pred_region
          %s561 = smul.u32 4, %s18
        $region48: #{actor_critic_forward.1} parent=35 // pred_fallthru
          _
      $region36: #{actor_critic_forward.1} parent=5 // pred_fallthru
        _
      %p562 = scmp.le.s32.totalorder 2, %s13
      // Predicated region
      $region49: #{actor_critic_forward.1} parent=5 // pred_check
        %p563 = pneg %p562
      $region50: #{actor_critic_forward.1} parent=5 // pred_check_branch
        %565 = sbr.rel (%p563) target = $region52
      $region51: #{actor_critic_forward.1} parent=5 // pred_region
        %s566 = ssub.s32 %s13, 2
        // Predicated region
        $region53: #{actor_critic_forward.1} parent=51 // pred_check
          %p567 = pneg %p131
        $region54: #{actor_critic_forward.1} parent=51 // pred_check_branch
          %569 = sbr.rel (%p567) target = $region56
        $region55: #{actor_critic_forward.1} parent=51 // pred_region
          %s570 = smul.u32 4, %s19
          %p571 = scmp.lt.s32.totalorder %s570, 7
          %s572 = scalar_select %p571, %s570, 7
          %s573 = smul.addr %s572, 8
          %s574 = scalar_lea.vmem %s4, %s573
        $region56: #{actor_critic_forward.1} parent=51 // pred_fallthru
          _
        // Predicated region
        $region57: #{actor_critic_forward.1} parent=51 // pred_check
          %p575 = pneg %p157
        $region58: #{actor_critic_forward.1} parent=51 // pred_check_branch
          %577 = sbr.rel (%p575) target = $region60
        $region59: #{actor_critic_forward.1} parent=51 // pred_region
          %s578 = smul.u32 4, %s19
          %p579 = scmp.lt.s32.totalorder %s578, 7
          %s580 = scalar_select %p579, %s578, 7
          %s581 = smul.addr %s580, 8
          %s582 = scalar_lea.vmem %s5, %s581
        $region60: #{actor_critic_forward.1} parent=51 // pred_fallthru
          _
      $region52: #{actor_critic_forward.1} parent=5 // pred_fallthru
        _
    $region6: #{actor_critic_forward.1} parent=1 // loop_footer
      %s17 = sadd.s32 1, %s13
    $region7: #{actor_critic_forward.1} parent=1 // loop_footer_branch
      %12 = sbr.rel target = $region3
    $region8: #{actor_critic_forward.1} parent=1 // loop_exit
      _
    %583 = vsyncpa [#allocation3], 1
    %s584 = scalar_lea.sflag [#allocation3], 1
    %585 = vsyncpa %s584, 1

</llo_original>
